<compile_context>
chip_gen: v7x
topology: tpu7x:2x2x1
jax: 0.10.0
libtpu: 0.0.40
codegen_flags: <defaults>
</compile_context>

<pallas_src>
import math

import jax
import jax.numpy as jnp
import numpy as np
from jax.experimental import pallas as pl
from jax.experimental.pallas import tpu as pltpu


def _round_up(n, m):
    return ((n + m - 1) // m) * m


def _chip_tile_out():
    """Pick the output-tile row count for the current TPU generation."""
    try:
        info = pltpu.get_tpu_info()
        s = " ".join(
            str(getattr(info, a))
            for a in ("chip_version", "version", "generation", "name")
            if getattr(info, a, None) is not None
        ).lower()
        if "5" in s:
            return 128          # v5e: 4x 128x128 MXU -> 128-row passes
        if "7" in s:
            return 512          # v7x: big VMEM headroom, fewer grid steps
        return 256              # v6e: 2x 256x256 MXU
    except Exception:
        return 256


def length_regulator(x, duration, max_len, *, tile_out=None, tile_k=None):
    """Pallas LengthRegulator forward.

    x:        [B, T_in, H] float
    duration: [B, T_in] frame counts (int, or float possibly containing NaN)
    max_len:  static int, output time length
    returns (output [B, max_len, H], mel_len [B] int32)
    """
    B, T, H = x.shape
    assert duration.shape == (B, T)

    if tile_out is None:
        tile_out = _chip_tile_out()
    if tile_k is None:
        tile_k = 128
    # Never tile larger than the (padded) problem.
    tile_out = min(tile_out, _round_up(max(max_len, 1), 128))
    tile_k = min(tile_k, _round_up(max(T, 1), 128))

    # ---- glue (plain XLA): duration sanitation + cumsums --------------------
    d = duration
    if jnp.issubdtype(d.dtype, jnp.floating):
        d = jnp.where(jnp.isnan(d), jnp.ones_like(d), d)   # NaN -> 1 (spec)
    dur = jnp.maximum(d.astype(jnp.int32), 0)               # max(int(.), 0)

    # ---- pad to lane/MXU-friendly shapes ------------------------------------
    T_pad = _round_up(T, tile_k)
    H_pad = _round_up(H, 128)
    L_pad = _round_up(max_len, tile_out)

    x_p = jnp.pad(x, ((0, 0), (0, T_pad - T), (0, H_pad - H)))
    dur_p = jnp.pad(dur, ((0, 0), (0, T_pad - T)))           # pad tokens: dur 0
    cs_p = jnp.cumsum(dur_p, axis=1)                         # inclusive cumsum
    cs_prev_p = cs_p - dur_p                                 # exclusive cumsum
    mel_len = cs_p[:, -1].astype(jnp.int32)
    # TODO(synk): PyTorch returns torch.LongTensor (int64); int32 here.

    cs2 = jnp.stack([cs_prev_p, cs_p], axis=1)               # (B, 2, T_pad)

    nk = T_pad // tile_k
    n_out_tiles = L_pad // tile_out

    # Per-token-block expanded frame range (monotone in the block index).
    blk_lo = cs_prev_p[:, ::tile_k]                          # (B, nk)
    blk_hi = cs_p[:, tile_k - 1::tile_k]                     # (B, nk)

    # Per-(b, output tile) window [start, end] of token blocks that can
    # intersect it (searchsorted on the monotone block bounds).
    tile_starts = jnp.arange(n_out_tiles, dtype=jnp.int32) * tile_out
    tile_ends = tile_starts + tile_out
    start = jnp.sum(blk_hi[:, None, :] <= tile_starts[None, :, None],
                    axis=-1).astype(jnp.int32)               # (B, J)
    end = (jnp.sum(blk_lo[:, None, :] < tile_ends[None, :, None],
                   axis=-1).astype(jnp.int32) - 1)           # (B, J)
    start = jnp.clip(start, 0, nk - 1)
    end = jnp.clip(end, 0, nk - 1)

    # Flat 1-D SMEM tables: [b, j] -> (start, end), [b, k] -> (lo, hi).
    window = jnp.stack([start, end], axis=-1).reshape(-1)     # (B*J*2,)
    bounds = jnp.stack([blk_lo, blk_hi], axis=-1).reshape(-1)  # (B*nk*2,)

    def kernel(window_ref, bounds_ref, cs_ref, x_ref, o_ref, acc_ref):
        # window_ref, bounds_ref : SMEM flat int32 tables (scalar prefetch)
        # cs_ref                 : VMEM (1, 2, tile_k) int32 cumsums
        # x_ref                  : VMEM (1, tile_k, H_pad)
        # o_ref                  : VMEM (1, tile_out, H_pad)
        # acc_ref                : VMEM (tile_out, H_pad) f32 scratch
        b = pl.program_id(0)
        j = pl.program_id(1)
        k = pl.program_id(2)

        @pl.when(k == 0)
        def _init():
            acc_ref[...] = jnp.zeros_like(acc_ref)

        w = (b * n_out_tiles + j) * 2
        w_start = window_ref[w]
        w_end = window_ref[w + 1]
        kk = w_start + k                  # logical token block (unclamped)
        not_clamped = kk <= w_end         # guard: repeated block counted once

        kk_c = jnp.minimum(kk, w_end)     # block actually resident in VMEM
        p = (b * nk + kk_c) * 2
        lo = bounds_ref[p]
        hi = bounds_ref[p + 1]

        tile_lo = j * tile_out
        tile_hi = tile_lo + tile_out
        do_acc = jnp.logical_and(
            not_clamped,
            jnp.logical_and(jnp.logical_and(lo < tile_hi, hi > tile_lo),
                            hi > lo))

        @pl.when(do_acc)
        def _accumulate():
            # (tile_out, 1) iota; the widening to (tile_out, tile_k) happens
            # inside the two compares via broadcasting.
            t_out = tile_lo + jax.lax.broadcasted_iota(
                jnp.int32, (tile_out, 1), 0)
            cs_prev = cs_ref[0, 0:1, :]                # (1, tile_k)
            cs = cs_ref[0, 1:2, :]                     # (1, tile_k)
            # Mask is exactly 0/1 in x's dtype; the f32-accumulated matmul
            # reproduces rows of x exactly (ranges are disjoint).
            m = jnp.logical_and(t_out >= cs_prev, t_out < cs).astype(x_ref.dtype)
            acc_ref[...] += jnp.dot(m, x_ref[0],
                                    preferred_element_type=jnp.float32)

        @pl.when(k == pl.num_programs(2) - 1)
        def _finalize():
            o_ref[0] = acc_ref[...].astype(o_ref.dtype)

    def _kk_map(b, j, k, window_ref):
        # Data-dependent block index: saturates at the window end, so grid
        # steps past the window re-use the resident block (no new DMA).
        w = (b * n_out_tiles + j) * 2
        return jnp.minimum(window_ref[w] + k, window_ref[w + 1])

    dtype_bytes = jnp.dtype(x.dtype).itemsize
    # Post-dedup estimate: x is read ~once (plus block-window slack); each
    # output tile only does MXU work over its token window.
    eff_k = min(T_pad, tile_out + 2 * tile_k)
    cost = pl.CostEstimate(
        flops=2 * B * L_pad * eff_k * H_pad,
        transcendentals=0,
        bytes_accessed=(B * T_pad * H_pad * dtype_bytes          # x (~once)
                        + B * 2 * T_pad * 4                      # cumsums
                        + B * L_pad * H_pad * dtype_bytes),      # out (write)
    )

    out_p = pl.pallas_call(
        kernel,
        out_shape=jax.ShapeDtypeStruct((B, L_pad, H_pad), x.dtype),
        grid_spec=pltpu.PrefetchScalarGridSpec(
            num_scalar_prefetch=2,                   # window, bounds -> SMEM
            grid=(B, n_out_tiles, nk),
            in_specs=[
                pl.BlockSpec((1, 2, tile_k),
                             lambda b, j, k, wr, br: (b, 0, _kk_map(b, j, k, wr))),
                pl.BlockSpec((1, tile_k, H_pad),
                             lambda b, j, k, wr, br: (b, _kk_map(b, j, k, wr), 0)),
            ],
            out_specs=pl.BlockSpec((1, tile_out, H_pad),
                                   lambda b, j, k, wr, br: (b, j, 0)),
            scratch_shapes=[pltpu.VMEM((tile_out, H_pad), jnp.float32)],
        ),
        compiler_params=pltpu.CompilerParams(
            dimension_semantics=("parallel", "parallel", "arbitrary")),
        cost_estimate=cost,
    )(window, bounds, cs2, x_p)

    return out_p[:, :max_len, :H], mel_len


def _reference(x, duration, max_len):
    # Pure-numpy reference reproducing the PyTorch loop semantics.
    x = np.asarray(x)
    duration = np.asarray(duration)
    B, T, H = x.shape
    out = np.zeros((B, max_len, H), dtype=x.dtype)
    mel_len = np.zeros((B,), dtype=np.int32)
    for b in range(B):
        rows = []
        for i in range(T):
            dd = float(duration[b, i])
            if math.isnan(dd):
                dd = 1.0
            dd = max(int(dd), 0)
            rows.append(np.repeat(x[b, i:i + 1], dd, axis=0))
        exp = np.concatenate(rows, axis=0) if rows else np.zeros((0, H), x.dtype)
        mel_len[b] = exp.shape[0]
        n = min(exp.shape[0], max_len)
        out[b, :n] = exp[:n]
    return out, mel_len


if __name__ == "__main__":
    key = jax.random.PRNGKey(0)

    # --- small test (module-scale shapes) ------------------------------------
    kx, kd = jax.random.split(key)
    B, T, H = 2, 8, 32
    MAX_LEN = 48
    x = jax.random.normal(kx, (B, T, H), dtype=jnp.float32)
    duration = jax.random.randint(kd, (B, T), minval=0, maxval=7, dtype=jnp.int32)

    out, mel_len = length_regulator(x, duration, MAX_LEN)
    out = jax.block_until_ready(out)
    mel_len = jax.block_until_ready(mel_len)

    ref_out, ref_len = _reference(x, duration, MAX_LEN)
    np.testing.assert_allclose(np.asarray(out), ref_out, rtol=1e-6, atol=1e-6)
    np.testing.assert_array_equal(np.asarray(mel_len), ref_len)

    # --- multiple output tiles / token blocks (exercises the DMA dedup) ------
    kx2, kd2 = jax.random.split(jax.random.PRNGKey(0), 2)
    B2, T2, H2 = 2, 160, 32
    MAX_LEN2 = 320
    x2 = jax.random.normal(kx2, (B2, T2, H2), dtype=jnp.float32)
    dur2 = jax.random.randint(kd2, (B2, T2), minval=0, maxval=4, dtype=jnp.int32)

    out2, len2 = length_regulator(x2, dur2, MAX_LEN2)
    out2 = jax.block_until_ready(out2)
    len2 = jax.block_until_ready(len2)

    ref_out2, ref_len2 = _reference(x2, dur2, MAX_LEN2)
    np.testing.assert_allclose(np.asarray(out2), ref_out2, rtol=1e-6, atol=1e-6)
    np.testing.assert_array_equal(np.asarray(len2), ref_len2)

    # --- float durations containing NaN (NaN -> 1 per spec) ------------------
    dur3 = dur2.astype(jnp.float32).at[0, 3].set(jnp.nan).at[1, 7].set(jnp.nan)
    out3, len3 = length_regulator(x2, dur3, MAX_LEN2)
    out3 = jax.block_until_ready(out3)
    len3 = jax.block_until_ready(len3)

    ref_out3, ref_len3 = _reference(x2, np.asarray(dur3), MAX_LEN2)
    np.testing.assert_allclose(np.asarray(out3), ref_out3, rtol=1e-6, atol=1e-6)
    np.testing.assert_array_equal(np.asarray(len3), ref_len3)

    print("KERNEL_OK")
</pallas_src>

<mosaic_0001>
module attributes {stable_mosaic.version = 11 : i64} {
  func.func @kernel(%arg0: i32, %arg1: i32, %arg2: i32, %arg3: memref<4xi32, #tpu.memory_space<smem>>, %arg4: memref<4xi32, #tpu.memory_space<smem>>, %arg5: memref<1x2x128xi32, #tpu.memory_space<vmem>>, %arg6: memref<1x128x128xf32, #tpu.memory_space<vmem>>, %arg7: memref<1x128x128xf32, #tpu.memory_space<vmem>>, %arg8: memref<128x128xf32, #tpu.memory_space<vmem>>) attributes {dimension_semantics = [#tpu.dimension_semantics<parallel>, #tpu.dimension_semantics<parallel>, #tpu.dimension_semantics<arbitrary>], iteration_bounds = array<i64: 2, 1, 1>, scalar_prefetch = 2 : i64, scratch_operands = 1 : i64, tpu.core_type = #tpu.core_type<tc>, window_params = [{transform_indices = @transform_0, window_bounds = array<i64: 1, 2, 128>}, {transform_indices = @transform_1, window_bounds = array<i64: 1, 128, 128>}, {transform_indices = @transform_2, window_bounds = array<i64: 1, 128, 128>}]} {
    %c0_i32 = arith.constant 0 : i32
    %0 = arith.cmpi eq, %arg2, %c0_i32 : i32
    %1 = arith.extui %0 : i1 to i32
    %c0_i32_0 = arith.constant 0 : i32
    %2 = arith.cmpi ne, %1, %c0_i32_0 : i32
    scf.if %2 {
      %cst = arith.constant 0.000000e+00 : f32
      %35 = vector.broadcast %cst : f32 to vector<128x128xf32>
      %c0 = arith.constant 0 : index
      %c0_9 = arith.constant 0 : index
      %36 = vector.load %arg8[%c0, %c0_9] : memref<128x128xf32, #tpu.memory_space<vmem>>, vector<128x128xf32>
      tpu.vector_store %arg8[%c0, %c0_9], %35 {strides = array<i32>} : memref<128x128xf32, #tpu.memory_space<vmem>>, vector<128x128xf32>,
    } else {
    }
    %c1_i32 = arith.constant 1 : i32
    %3 = arith.muli %arg0, %c1_i32 : i32
    %4 = arith.addi %3, %arg1 : i32
    %c2_i32 = arith.constant 2 : i32
    %5 = arith.muli %4, %c2_i32 : i32
    %6 = arith.index_cast %5 : i32 to index
    %7 = memref.load %arg3[%6] : memref<4xi32, #tpu.memory_space<smem>>
    %c1_i32_1 = arith.constant 1 : i32
    %8 = arith.addi %5, %c1_i32_1 : i32
    %9 = arith.index_cast %8 : i32 to index
    %10 = memref.load %arg3[%9] : memref<4xi32, #tpu.memory_space<smem>>
    %11 = arith.addi %7, %arg2 : i32
    %12 = arith.cmpi sle, %11, %10 : i32
    %13 = arith.minsi %11, %10 : i32
    %c1_i32_2 = arith.constant 1 : i32
    %14 = arith.muli %arg0, %c1_i32_2 : i32
    %15 = arith.addi %14, %13 : i32
    %c2_i32_3 = arith.constant 2 : i32
    %16 = arith.muli %15, %c2_i32_3 : i32
    %17 = arith.index_cast %16 : i32 to index
    %18 = memref.load %arg4[%17] : memref<4xi32, #tpu.memory_space<smem>>
    %c1_i32_4 = arith.constant 1 : i32
    %19 = arith.addi %16, %c1_i32_4 : i32
    %20 = arith.index_cast %19 : i32 to index
    %21 = memref.load %arg4[%20] : memref<4xi32, #tpu.memory_space<smem>>
    %c128_i32 = arith.constant 128 : i32
    %22 = arith.muli %arg1, %c128_i32 : i32
    %c128_i32_5 = arith.constant 128 : i32
    %23 = arith.addi %22, %c128_i32_5 : i32
    %24 = arith.cmpi slt, %18, %23 : i32
    %25 = arith.cmpi sgt, %21, %22 : i32
    %26 = arith.andi %24, %25 : i1
    %27 = arith.cmpi sgt, %21, %18 : i32
    %28 = arith.andi %26, %27 : i1
    %29 = arith.andi %12, %28 : i1
    %30 = arith.extui %29 : i1 to i32
    %c0_i32_6 = arith.constant 0 : i32
    %31 = arith.cmpi ne, %30, %c0_i32_6 : i32
    scf.if %31 {
      %35 = tpu.iota {dimensions = array<i32: 0>} : vector<128x1xi32>
      %36 = vector.broadcast %22 : i32 to vector<128x1xi32>
      %37 = arith.addi %36, %35 : vector<128x1xi32>
      %c0 = arith.constant 0 : index
      %c0_9 = arith.constant 0 : index
      %c0_10 = arith.constant 0 : index
      %38 = vector.load %arg5[%c0, %c0_9, %c0_10] : memref<1x2x128xi32, #tpu.memory_space<vmem>>, vector<1x1x128xi32>
      %39 = vector.shape_cast %38 : vector<1x1x128xi32> to vector<1x128xi32>
      %c0_11 = arith.constant 0 : index
      %c1 = arith.constant 1 : index
      %c0_12 = arith.constant 0 : index
      %40 = vector.load %arg5[%c0_11, %c1, %c0_12] : memref<1x2x128xi32, #tpu.memory_space<vmem>>, vector<1x1x128xi32>
      %41 = vector.shape_cast %40 : vector<1x1x128xi32> to vector<1x128xi32>
      %42 = vector.broadcast %37 : vector<128x1xi32> to vector<128x128xi32>
      %43 = vector.broadcast %39 : vector<1x128xi32> to vector<128x128xi32>
      %44 = arith.cmpi sge, %42, %43 : vector<128x128xi32>
      %45 = vector.broadcast %37 : vector<128x1xi32> to vector<128x128xi32>
      %46 = vector.broadcast %41 : vector<1x128xi32> to vector<128x128xi32>
      %47 = arith.cmpi slt, %45, %46 : vector<128x128xi32>
      %48 = arith.andi %44, %47 : vector<128x128xi1>
      %49 = arith.extui %48 : vector<128x128xi1> to vector<128x128xi32>
      %50 = arith.sitofp %49 : vector<128x128xi32> to vector<128x128xf32>
      %c0_13 = arith.constant 0 : index
      %c0_14 = arith.constant 0 : index
      %51 = vector.load %arg8[%c0_13, %c0_14] : memref<128x128xf32, #tpu.memory_space<vmem>>, vector<128x128xf32>
      %c0_15 = arith.constant 0 : index
      %c0_16 = arith.constant 0 : index
      %c0_17 = arith.constant 0 : index
      %52 = vector.load %arg6[%c0_15, %c0_16, %c0_17] : memref<1x128x128xf32, #tpu.memory_space<vmem>>, vector<1x128x128xf32>
      %53 = vector.shape_cast %52 : vector<1x128x128xf32> to vector<128x128xf32>
      %cst = arith.constant dense<0.000000e+00> : vector<128x128xf32>
      %54 = tpu.matmul %50, %53, %cst {dimension_numbers = #tpu.dot_dimension_numbers<[1], [0], [0], [1], [0, 0, 1, 1], [], []>} : vector<128x128xf32>, vector<128x128xf32>, vector<128x128xf32> -> vector<128x128xf32>
      %55 = arith.addf %51, %54 : vector<128x128xf32>
      %c0_18 = arith.constant 0 : index
      %c0_19 = arith.constant 0 : index
      %56 = vector.load %arg8[%c0_18, %c0_19] : memref<128x128xf32, #tpu.memory_space<vmem>>, vector<128x128xf32>
      tpu.vector_store %arg8[%c0_18, %c0_19], %55 {strides = array<i32>} : memref<128x128xf32, #tpu.memory_space<vmem>>, vector<128x128xf32>,
    } else {
    }
    %c0_i32_7 = arith.constant 0 : i32
    %32 = arith.cmpi eq, %arg2, %c0_i32_7 : i32
    %33 = arith.extui %32 : i1 to i32
    %c0_i32_8 = arith.constant 0 : i32
    %34 = arith.cmpi ne, %33, %c0_i32_8 : i32
    scf.if %34 {
      %c0 = arith.constant 0 : index
      %c0_9 = arith.constant 0 : index
      %35 = vector.load %arg8[%c0, %c0_9] : memref<128x128xf32, #tpu.memory_space<vmem>>, vector<128x128xf32>
      %c0_10 = arith.constant 0 : index
      %c0_11 = arith.constant 0 : index
      %c0_12 = arith.constant 0 : index
      %36 = vector.load %arg7[%c0_10, %c0_11, %c0_12] : memref<1x128x128xf32, #tpu.memory_space<vmem>>, vector<1x128x128xf32>
      %37 = vector.shape_cast %36 : vector<1x128x128xf32> to vector<128x128xf32>
      %38 = vector.shape_cast %35 : vector<128x128xf32> to vector<1x128x128xf32>
      tpu.vector_store %arg7[%c0_10, %c0_11, %c0_12], %38 {strides = array<i32>} : memref<1x128x128xf32, #tpu.memory_space<vmem>>, vector<1x128x128xf32>,
    } else {
    }
    return
  }
  func.func @transform_0(%arg0: i32, %arg1: i32, %arg2: i32, %arg3: memref<4xi32, #tpu.memory_space<smem>>, %arg4: memref<4xi32, #tpu.memory_space<smem>>) -> (i32, i32, i32) {
    %c1_i32 = arith.constant 1 : i32
    %0 = arith.muli %arg0, %c1_i32 : i32
    %1 = arith.addi %0, %arg1 : i32
    %c2_i32 = arith.constant 2 : i32
    %2 = arith.muli %1, %c2_i32 : i32
    %3 = arith.index_cast %2 : i32 to index
    %4 = memref.load %arg3[%3] : memref<4xi32, #tpu.memory_space<smem>>
    %5 = arith.addi %4, %arg2 : i32
    %c1_i32_0 = arith.constant 1 : i32
    %6 = arith.addi %2, %c1_i32_0 : i32
    %7 = arith.index_cast %6 : i32 to index
    %8 = memref.load %arg3[%7] : memref<4xi32, #tpu.memory_space<smem>>
    %9 = arith.minsi %5, %8 : i32
    %c0_i32 = arith.constant 0 : i32
    %c0_i32_1 = arith.constant 0 : i32
    return %arg0, %c0_i32, %9 : i32, i32, i32
  }
  func.func @transform_1(%arg0: i32, %arg1: i32, %arg2: i32, %arg3: memref<4xi32, #tpu.memory_space<smem>>, %arg4: memref<4xi32, #tpu.memory_space<smem>>) -> (i32, i32, i32) {
    %c1_i32 = arith.constant 1 : i32
    %0 = arith.muli %arg0, %c1_i32 : i32
    %1 = arith.addi %0, %arg1 : i32
    %c2_i32 = arith.constant 2 : i32
    %2 = arith.muli %1, %c2_i32 : i32
    %3 = arith.index_cast %2 : i32 to index
    %4 = memref.load %arg3[%3] : memref<4xi32, #tpu.memory_space<smem>>
    %5 = arith.addi %4, %arg2 : i32
    %c1_i32_0 = arith.constant 1 : i32
    %6 = arith.addi %2, %c1_i32_0 : i32
    %7 = arith.index_cast %6 : i32 to index
    %8 = memref.load %arg3[%7] : memref<4xi32, #tpu.memory_space<smem>>
    %9 = arith.minsi %5, %8 : i32
    %c0_i32 = arith.constant 0 : i32
    %c0_i32_1 = arith.constant 0 : i32
    return %arg0, %9, %c0_i32 : i32, i32, i32
  }
  func.func @transform_2(%arg0: i32, %arg1: i32, %arg2: i32, %arg3: memref<4xi32, #tpu.memory_space<smem>>, %arg4: memref<4xi32, #tpu.memory_space<smem>>) -> (i32, i32, i32) {
    %c0_i32 = arith.constant 0 : i32
    %c0_i32_0 = arith.constant 0 : i32
    return %arg0, %arg1, %c0_i32 : i32, i32, i32
  }
}

</mosaic_0001>

<llo_original>
// kernel: tpu_custom_call.1
$region0: #{tpu_custom_call.1}
  #allocation0 [shape = 'u32[]', space=smem, size = 0x4, offset = 0x4, fixed_abs, tag = 'smem constant byte address 0x4 - core index']
  #allocation1 [shape = 'u32[144,128]{1,0:T(1,128)}', space=vmem, size = 0x12000, scoped, tag = 'internal scratch']
  #allocation2 [shape = 'f32[128,128]{1,0:T(8,128)}', space=vmem, size = 0x10000, scoped, tag = 'scratch operand']
  #allocation3 [shape = 's32[1]{0}', space=sflag, size = 0x4, scoped, tag = 'scoped memory for tpu_custom_call.1']
  #allocation4 [shape = 'u8[512]{0}', space=smem, size = 0x200, scoped, tag = 'prefetched SMEM operand 0']
  #allocation5 [shape = 'u8[512]{0}', space=smem, size = 0x200, scoped, tag = 'prefetched SMEM operand 1']
  %s0 = inlined_call_operand.hbm [shape: s32[4], index: 0, kind: input, shape index: {}]
  %s1 = inlined_call_operand.vmem [shape: s32[4], index: 1, kind: input, shape index: {}]
  %s2 = inlined_call_operand.vmem [shape: s32[2,2,128], index: 2, kind: input, shape index: {}]
  %s3 = inlined_call_operand.hbm [shape: f32[2,128,128], index: 3, kind: input, shape index: {}]
  %s4 = inlined_call_operand.hbm [shape: f32[2,128,128], index: 4, kind: output, shape index: {}]
  %s5 = sld [smem:[#allocation0]]
  $region57: #{tpu_custom_call.1} parent=0
    _
  %s7 = ssub.s32 1, %s5
  %s8 = scalar_select 0, %s7, %s5
  %10 = dma.hbm_to_smem %s0, 16, [#allocation4], [#allocation3]
  %s11 = sshll.u32 %s1, 4
  %s12 = int_to_ptr.vmem [resolvable:$true] %s11
  %14 = dma.vmem_to_smem %s12, 16, [#allocation5], [#allocation3]
  %15 = dma.done [#allocation3], 32
  %16 = sfence
  $region1: #{tpu_custom_call.1} parent=0
    #allocation6 [shape = 'u8[131072]{0}', space=vmem, size = 0x20000, scoped, tag = 'input window, operand 3']
    #allocation7 [shape = 's32[2]{0}', space=sflag, size = 0x8, scoped, tag = 'scoped memory for tpu_custom_call.1']
    #allocation8 [shape = 's32[2]{0}', space=sflag, size = 0x8, scoped, tag = 'scoped memory for tpu_custom_call.1']
    #allocation9 [shape = 'u8[131072]{0}', space=vmem, size = 0x20000, scoped, tag = 'output window, operand 0']
    %17 = vsyncpa [#allocation7], 0
    %s18 = scalar_lea.sflag [#allocation7], 1
    %19 = vsyncpa %s18, 0
    %20 = vsyncpa [#allocation8], 0
    %s21 = scalar_lea.sflag [#allocation8], 1
    %22 = vsyncpa %s21, 0
    loop: start=0, step=1, limit=4
    $region2: #{tpu_custom_call.1} parent=1 // loop_pre_header
      _
    $region3: #{tpu_custom_call.1} parent=1 // loop_header
      %s24 = sphi 0, %s28
      %p25 = scmp.ge.s32.totalorder %s24, 4
      %s31 = sphi 0, %s50
      %s32 = sphi 0, %s46
      %s33 = sphi 0, %s42
      %s34 = sphi 0, %s31
      %s35 = sphi 0, %s32
      %s36 = sphi 0, %s33
      %s37 = sphi 0, %s34
      %s38 = sphi 0, %s35
      %s39 = sphi 0, %s36
      %s71 = sphi 0, %s73
      %s74 = sphi 0, %s71
      %s75 = sphi 0, %s74
      %s91 = sphi 0, %s75
      %s115 = sphi 0, %s117
      %s118 = sphi 0, %s115
      %s119 = sphi 0, %s118
      %s135 = sphi 0, %s119
      %s143 = sphi 0, %s145
      %s146 = sphi 0, %s143
      %s147 = sphi 0, %s146
      %s163 = sphi 0, %s147
    $region4: #{tpu_custom_call.1} parent=1 // loop_header_branch
      %27 = sbr.rel (%p25) target = $region8
    $region5: #{tpu_custom_call.1} parent=1 // loop_body
      %s29 = ssub.s32 %s24, 1
      %s30 = ssub.s32 %s24, 2
      %s40 = sadd.s32 1, %s33
      %p41 = scmp.ge.s32.totalorder %s40, 1
      %s42 = scalar_select %p41, 0, %s40
      %s43 = sadd.s32 1, %s32
      %s44 = scalar_select %p41, %s43, %s32
      %p45 = scmp.ge.s32.totalorder %s44, 1
      %s46 = scalar_select %p45, 0, %s44
      %s47 = sadd.s32 1, %s31
      %s48 = scalar_select %p45, %s47, %s31
      %p49 = scmp.ge.s32.totalorder %s48, 2
      %s50 = scalar_select %p49, 0, %s48
      %s51 = sadd.s32 %s31, %s32
      %s52 = smul.u32 %s51, 2
      %s53 = sld [smem:[#allocation4 + %s52]]
      %s54 = sadd.s32 %s53, %s33
      %s55 = sadd.s32 %s52, 1
      %s56 = sld [smem:[#allocation4 + %s55]]
      %p57 = scmp.lt.s32.totalorder %s54, %s56
      %s58 = scalar_select %p57, %s54, %s56
      %s59 = sadd.s32 %s50, %s46
      %s60 = smul.u32 %s59, 2
      %s61 = sld [smem:[#allocation4 + %s60]]
      %s62 = sadd.s32 %s61, %s42
      %s63 = sadd.s32 %s60, 1
      %s64 = sld [smem:[#allocation4 + %s63]]
      %p65 = scmp.lt.s32.totalorder %s62, %s64
      %s66 = scalar_select %p65, %s62, %s64
      %s67 = ssub.s32 %s31, %s50
      %s68 = ssub.s32 %s58, %s66
      %s69 = sor.u32 %s67, %s68
      %p70 = scmp.eq.s32.totalorder %s69, 0
      %s72 = sadd.s32 %s71, 1
      %s73 = scalar_select %p70, %s71, %s72
      %p76 = pneg %p70
      %p77 = scmp.eq.s32.totalorder %s24, 1
      %p78 = por %p76, %p77
      %p79 = scmp.ne.s32.totalorder %s71, %s74
      %p80 = scmp.eq.s32.totalorder %s24, 0
      %p81 = por %p79, %p80
      %p82 = scmp.ne.s32.totalorder %s71, %s74
      %p83 = scmp.eq.s32.totalorder %s29, 1
      %p84 = por %p82, %p83
      %p85 = scmp.ne.s32.totalorder %s74, %s75
      %p86 = scmp.eq.s32.totalorder %s29, 0
      %p87 = por %p85, %p86
      %p88 = scmp.ne.s32.totalorder %s74, %s75
      %p89 = scmp.eq.s32.totalorder %s30, 1
      %p90 = por %p88, %p89
      %p92 = scmp.ne.s32.totalorder %s75, %s91
      %p93 = scmp.eq.s32.totalorder %s30, 0
      %p94 = por %p92, %p93
      %s95 = sadd.s32 %s31, %s32
      %s96 = smul.u32 %s95, 2
      %s97 = sld [smem:[#allocation4 + %s96]]
      %s98 = sadd.s32 %s97, %s33
      %s99 = sadd.s32 %s96, 1
      %s100 = sld [smem:[#allocation4 + %s99]]
      %p101 = scmp.lt.s32.totalorder %s98, %s100
      %s102 = scalar_select %p101, %s98, %s100
      %s103 = sadd.s32 %s50, %s46
      %s104 = smul.u32 %s103, 2
      %s105 = sld [smem:[#allocation4 + %s104]]
      %s106 = sadd.s32 %s105, %s42
      %s107 = sadd.s32 %s104, 1
      %s108 = sld [smem:[#allocation4 + %s107]]
      %p109 = scmp.lt.s32.totalorder %s106, %s108
      %s110 = scalar_select %p109, %s106, %s108
      %s111 = ssub.s32 %s31, %s50
      %s112 = ssub.s32 %s102, %s110
      %s113 = sor.u32 %s111, %s112
      %p114 = scmp.eq.s32.totalorder %s113, 0
      %s116 = sadd.s32 %s115, 1
      %s117 = scalar_select %p114, %s115, %s116
      %p120 = pneg %p114
      %p121 = scmp.eq.s32.totalorder %s24, 1
      %p122 = por %p120, %p121
      %p123 = scmp.ne.s32.totalorder %s115, %s118
      %p124 = scmp.eq.s32.totalorder %s24, 0
      %p125 = por %p123, %p124
      %p126 = scmp.ne.s32.totalorder %s115, %s118
      %p127 = scmp.eq.s32.totalorder %s29, 1
      %p128 = por %p126, %p127
      %p129 = scmp.ne.s32.totalorder %s118, %s119
      %p130 = scmp.eq.s32.totalorder %s29, 0
      %p131 = por %p129, %p130
      %p132 = scmp.ne.s32.totalorder %s118, %s119
      %p133 = scmp.eq.s32.totalorder %s30, 1
      %p134 = por %p132, %p133
      %p136 = scmp.ne.s32.totalorder %s119, %s135
      %p137 = scmp.eq.s32.totalorder %s30, 0
      %p138 = por %p136, %p137
      %s139 = ssub.s32 %s31, %s50
      %s140 = ssub.s32 %s32, %s46
      %s141 = sor.u32 %s139, %s140
      %p142 = scmp.eq.s32.totalorder %s141, 0
      %s144 = sadd.s32 %s143, 1
      %s145 = scalar_select %p142, %s143, %s144
      %p148 = pneg %p142
      %p149 = scmp.eq.s32.totalorder %s24, 1
      %p150 = por %p148, %p149
      %p151 = scmp.ne.s32.totalorder %s143, %s146
      %p152 = scmp.eq.s32.totalorder %s24, 0
      %p153 = por %p151, %p152
      %p154 = scmp.ne.s32.totalorder %s143, %s146
      %p155 = scmp.eq.s32.totalorder %s29, 1
      %p156 = por %p154, %p155
      %p157 = scmp.ne.s32.totalorder %s146, %s147
      %p158 = scmp.eq.s32.totalorder %s29, 0
      %p159 = por %p157, %p158
      %p160 = scmp.ne.s32.totalorder %s146, %s147
      %p161 = scmp.eq.s32.totalorder %s30, 1
      %p162 = por %p160, %p161
      %p164 = scmp.ne.s32.totalorder %s147, %s163
      %p165 = scmp.eq.s32.totalorder %s30, 0
      %p166 = por %p164, %p165
      %p167 = scmp.le.s32.totalorder 1, %s24
      %p168 = scmp.lt.s32.totalorder %s24, 3
      %p169 = pnand %p167, %p168
      %p170 = pneg %p169
      // Predicated region
      $region9: #{tpu_custom_call.1} parent=5 // pred_check
        _
      $region10: #{tpu_custom_call.1} parent=5 // pred_check_branch
        %172 = sbr.rel (%p169) target = $region12
      $region11: #{tpu_custom_call.1} parent=5 // pred_region
        %s173 = ssub.s32 %s24, 1
      $region12: #{tpu_custom_call.1} parent=5 // pred_fallthru
        _
      %p174 = scmp.lt.s32.totalorder %s24, 2
      // Predicated region
      $region13: #{tpu_custom_call.1} parent=5 // pred_check
        %p175 = pneg %p174
      $region14: #{tpu_custom_call.1} parent=5 // pred_check_branch
        %177 = sbr.rel (%p175) target = $region16
      $region15: #{tpu_custom_call.1} parent=5 // pred_region
        // Predicated region
        $region17: #{tpu_custom_call.1} parent=15 // pred_check
          %p178 = pneg %p81
        $region18: #{tpu_custom_call.1} parent=15 // pred_check_branch
          %180 = sbr.rel (%p178) target = $region20
        $region19: #{tpu_custom_call.1} parent=15 // pred_region
          %s181 = sadd.s32 %s31, %s32
          %s182 = smul.u32 %s181, 2
          %s183 = sld [smem:[#allocation4 + %s182]]
          %s184 = sadd.s32 %s183, %s33
          %s185 = sadd.s32 %s182, 1
          %s186 = sld [smem:[#allocation4 + %s185]]
          %p187 = scmp.lt.s32.totalorder %s184, %s186
          %s188 = scalar_select %p187, %s184, %s186
          %p189 = scmp.lt.s32.totalorder %s31, 1
          %s190 = scalar_select %p189, %s31, 1
          %p191 = scmp.lt.s32.totalorder %s188, 0
          %s192 = scalar_select %p191, %s188, 0
          %s193 = sadd.s32 %s192, %s190
          %s194 = smul.addr %s193, 2
          %s195 = scalar_lea.vmem %s2, %s194
          %s196 = sadd.s32 %s31, %s32
          %s197 = smul.u32 %s196, 2
          %s198 = sld [smem:[#allocation4 + %s197]]
          %s199 = sadd.s32 %s198, %s33
          %s200 = sadd.s32 %s197, 1
          %s201 = sld [smem:[#allocation4 + %s200]]
          %p202 = scmp.lt.s32.totalorder %s199, %s201
          %s203 = scalar_select %p202, %s199, %s201
        $region20: #{tpu_custom_call.1} parent=15 // pred_fallthru
          _
        // Predicated region
        $region21: #{tpu_custom_call.1} parent=15 // pred_check
          %p204 = pneg %p125
        $region22: #{tpu_custom_call.1} parent=15 // pred_check_branch
          %206 = sbr.rel (%p204) target = $region24
        $region23: #{tpu_custom_call.1} parent=15 // pred_region
          %s207 = sand.u32 %s115, 1
          %s208 = scalar_lea.sflag [#allocation7], %s207
          %s209 = sand.u32 %s115, 1
          %s210 = smul.addr %s209, 128
          %s211 = scalar_lea.vmem [#allocation6], %s210
          %s212 = sadd.s32 %s31, %s32
          %s213 = smul.u32 %s212, 2
          %s214 = sld [smem:[#allocation4 + %s213]]
          %s215 = sadd.s32 %s214, %s33
          %s216 = sadd.s32 %s213, 1
          %s217 = sld [smem:[#allocation4 + %s216]]
          %p218 = scmp.lt.s32.totalorder %s215, %s217
          %s219 = scalar_select %p218, %s215, %s217
          %s220 = smul.u32 16, %s219
          %s222 = ssub.s32 2048, 2048
          %223 = vsyncadd %s208, %s222
          %s224 = smul.addr %s31, 16
          %s225 = sadd.s32 %s220, %s224
          %s226 = smul.addr %s225, 128
          %s227 = scalar_lea.hbm %s3, %s226
          %s228 = sshll.u32 %s211, 4
          %s229 = int_to_ptr.vmem [resolvable:$true] %s228
          %234 = dma.hbm_to_vmem [thread:$0]  %s227, 2048, %s229, %s208, 128, 128, 8
        $region24: #{tpu_custom_call.1} parent=15 // pred_fallthru
          _
      $region16: #{tpu_custom_call.1} parent=5 // pred_fallthru
        _
      %p235 = scmp.le.s32.totalorder 1, %s24
      %p236 = scmp.lt.s32.totalorder %s24, 3
      %p237 = pnand %p235, %p236
      %p238 = pneg %p237
      // Predicated region
      $region25: #{tpu_custom_call.1} parent=5 // pred_check
        _
      $region26: #{tpu_custom_call.1} parent=5 // pred_check_branch
        %240 = sbr.rel (%p237) target = $region28
      $region27: #{tpu_custom_call.1} parent=5 // pred_region
        %s241 = ssub.s32 %s24, 1
        %s242 = sand.u32 %s118, 1
        %s243 = scalar_lea.sflag [#allocation7], %s242
        %s244 = sand.u32 %s118, 1
        %s245 = smul.addr %s244, 128
        %s246 = scalar_lea.vmem [#allocation6], %s245
        // Predicated region
        $region29: #{tpu_custom_call.1} parent=27 // pred_check
          %p247 = pneg %p131
        $region30: #{tpu_custom_call.1} parent=27 // pred_check_branch
          %249 = sbr.rel (%p247) target = $region32
        $region31: #{tpu_custom_call.1} parent=27 // pred_region
          %250 = dma.done %s243, 2048
        $region32: #{tpu_custom_call.1} parent=27 // pred_fallthru
          _
        %s251 = sadd.s32 %s34, %s35
        %s252 = smul.u32 %s251, 2
        %s253 = sld [smem:[#allocation4 + %s252]]
        %s254 = sadd.s32 %s253, %s36
        %s255 = sadd.s32 %s252, 1
        %s256 = sld [smem:[#allocation4 + %s255]]
        %p257 = scmp.lt.s32.totalorder %s254, %s256
        %s258 = scalar_select %p257, %s254, %s256
        %p259 = scmp.lt.s32.totalorder %s34, 1
        %s260 = scalar_select %p259, %s34, 1
        %p261 = scmp.lt.s32.totalorder %s258, 0
        %s262 = scalar_select %p261, %s258, 0
        %s263 = sadd.s32 %s262, %s260
        %s264 = smul.addr %s263, 2
        %s265 = scalar_lea.vmem %s2, %s264
        %p266 = pneg %p87
        %p267 = pneg %p84
        %s268 = sand.u32 %s118, 1
        %s269 = scalar_lea.sflag [#allocation7], %s268
        %s270 = sand.u32 %s118, 1
        %s271 = smul.addr %s270, 128
        %s272 = scalar_lea.vmem [#allocation6], %s271
        %p273 = pneg %p131
        %p274 = pneg %p128
        %p275 = pneg %p159
        %p276 = pneg %p156
        %s277 = sand.u32 %s146, 1
        %s278 = scalar_lea.sflag [#allocation8], %s277
        %s279 = sand.u32 %s146, 1
        %s280 = smul.addr %s279, 128
        %s281 = scalar_lea.vmem [#allocation9], %s280
        %s282 = sadd.s32 %s34, %s35
        %s283 = smul.u32 %s282, 2
        %s284 = sld [smem:[#allocation4 + %s283]]
        %s285 = sadd.s32 %s284, %s36
        %s286 = sadd.s32 %s283, 1
        %s287 = sld [smem:[#allocation4 + %s286]]
        %p288 = scmp.lt.s32.totalorder %s285, %s287
        %s289 = scalar_select %p288, %s285, %s287
        %p290 = scmp.lt.s32.totalorder %s34, 1
        %s291 = scalar_select %p290, %s34, 1
        %p292 = scmp.lt.s32.totalorder %s289, 0
        %s293 = scalar_select %p292, %s289, 0
        %s294 = sadd.s32 %s293, %s291
        %s295 = smul.addr %s294, 2
        %s296 = scalar_lea.vmem %s2, %s295
        %s297 = sadd.s32 %s34, %s35
        %s298 = smul.u32 %s297, 2
        %s299 = sld [smem:[#allocation4 + %s298]]
        %s300 = sadd.s32 %s299, %s36
        %s301 = sadd.s32 %s298, 1
        %s302 = sld [smem:[#allocation4 + %s301]]
        %p303 = scmp.lt.s32.totalorder %s300, %s302
        %s304 = scalar_select %p303, %s300, %s302
        %s305 = sadd.s32 %s34, %s35
        %s306 = smul.u32 %s305, 2
        %s307 = sld [smem:[#allocation4 + %s306]]
        %s308 = sadd.s32 %s307, %s36
        %s309 = sadd.s32 %s306, 1
        %s310 = sld [smem:[#allocation4 + %s309]]
        %p311 = scmp.lt.s32.totalorder %s308, %s310
        %s312 = scalar_select %p311, %s308, %s310
        %s313 = smul.u32 16, %s312
        %s314 = smul.u32 16, %s35
        %p315 = scmp.eq.s32.totalorder %s36, 0
        // Predicated region
        $region33: #{tpu_custom_call.1} parent=27 // pred_check
          %p316 = pneg %p315
        $region34: #{tpu_custom_call.1} parent=27 // pred_check_branch
          %318 = sbr.rel (%p316) target = $region36
        $region35: #{tpu_custom_call.1} parent=27 // pred_region
          %319 = vst [vmem:[#allocation2] sm:$0xff] 0.0
          %320 = vst [vmem:[#allocation2 + $0x8] sm:$0xff] 0.0
          %321 = vst [vmem:[#allocation2 + $0x10] sm:$0xff] 0.0
          %322 = vst [vmem:[#allocation2 + $0x18] sm:$0xff] 0.0
          %323 = vst [vmem:[#allocation2 + $0x20] sm:$0xff] 0.0
          %324 = vst [vmem:[#allocation2 + $0x28] sm:$0xff] 0.0
          %325 = vst [vmem:[#allocation2 + $0x30] sm:$0xff] 0.0
          %326 = vst [vmem:[#allocation2 + $0x38] sm:$0xff] 0.0
          %327 = vst [vmem:[#allocation2 + $0x40] sm:$0xff] 0.0
          %328 = vst [vmem:[#allocation2 + $0x48] sm:$0xff] 0.0
          %329 = vst [vmem:[#allocation2 + $0x50] sm:$0xff] 0.0
          %330 = vst [vmem:[#allocation2 + $0x58] sm:$0xff] 0.0
          %331 = vst [vmem:[#allocation2 + $0x60] sm:$0xff] 0.0
          %332 = vst [vmem:[#allocation2 + $0x68] sm:$0xff] 0.0
          %333 = vst [vmem:[#allocation2 + $0x70] sm:$0xff] 0.0
          %334 = vst [vmem:[#allocation2 + $0x78] sm:$0xff] 0.0
        $region36: #{tpu_custom_call.1} parent=27 // pred_fallthru
          _
        %s335 = sadd.s32 %s34, %s35
        %s336 = smul.u32 %s335, 2
        %s337 = sld [smem:[#allocation4 + %s336]]
        %s338 = sadd.s32 %s336, 1
        %s339 = sld [smem:[#allocation4 + %s338]]
        %s340 = sadd.s32 %s337, %s36
        %p341 = scmp.le.s32.totalorder %s340, %s339
        %p342 = scmp.lt.s32.totalorder %s340, %s339
        %s343 = scalar_select %p342, %s340, %s339
        %s344 = sadd.s32 %s34, %s343
        %s345 = smul.u32 %s344, 2
        %s346 = sld [smem:[#allocation5 + %s345]]
        %s347 = sadd.s32 %s345, 1
        %s348 = sld [smem:[#allocation5 + %s347]]
        %s349 = smul.u32 %s35, 128
        %s350 = sadd.s32 %s349, 128
        %p351 = scmp.lt.s32.totalorder %s346, %s350
        %p352 = scmp.gt.s32.totalorder %s348, %s349
        %p353 = pnand %p351, %p352
        %p354 = pneg %p353
        %p355 = scmp.gt.s32.totalorder %s348, %s346
        %p356 = pnand %p354, %p355
        %p357 = pneg %p356
        %p358 = pnand %p341, %p357
        %p359 = pneg %p358
        // Predicated region
        $region37: #{tpu_custom_call.1} parent=27 // pred_check
          _
        $region38: #{tpu_custom_call.1} parent=27 // pred_check_branch
          %361 = sbr.rel (%p358) target = $region40
        $region39: #{tpu_custom_call.1} parent=27 // pred_region
          %v362 = vlaneseq
          %v363 = vshrl.u32 %v362, 7
          %v364 = vadd.s32 %v363, 8
          %v365 = vadd.s32 %v363, 16
          %v366 = vadd.s32 %v363, 24
          %v367 = vadd.s32 %v363, 32
          %v368 = vadd.s32 %v363, 40
          %v369 = vadd.s32 %v363, 48
          %v370 = vadd.s32 %v363, 56
          %v371 = vadd.s32 %v363, 64
          %v372 = vadd.s32 %v363, 72
          %v373 = vadd.s32 %v363, 80
          %v374 = vadd.s32 %v363, 88
          %v375 = vadd.s32 %v363, 96
          %v376 = vadd.s32 %v363, 104
          %v377 = vadd.s32 %v363, 112
          %v378 = vadd.s32 %v363, 120
          %v379 = vstv %s349
          %v380 = vadd.s32 %v379, %v363
          %v381 = vadd.s32 %v379, %v364
          %v382 = vadd.s32 %v379, %v365
          %v383 = vadd.s32 %v379, %v366
          %v384 = vadd.s32 %v379, %v367
          %v385 = vadd.s32 %v379, %v368
          %v386 = vadd.s32 %v379, %v369
          %v387 = vadd.s32 %v379, %v370
          %v388 = vadd.s32 %v379, %v371
          %v389 = vadd.s32 %v379, %v372
          %v390 = vadd.s32 %v379, %v373
          %v391 = vadd.s32 %v379, %v374
          %v392 = vadd.s32 %v379, %v375
          %v393 = vadd.s32 %v379, %v376
          %v394 = vadd.s32 %v379, %v377
          %v395 = vadd.s32 %v379, %v378
          %v396 = vld [vmem:[%s296] sm:$0x1]
          %v397 = vld [vmem:[%s296 + $0x1] sm:$0x1]
          %v398 = vlaneseq
          %v399 = vshrl.u32 %v398, 7
          %v400 = vsub.s32 0, %v399
          %v401 = vrot.slane %v396, %v400
          %vm402 = vcmp.ge.s32.totalorder %v380, %v401
          %vm403 = vcmp.ge.s32.totalorder %v381, %v401
          %vm404 = vcmp.ge.s32.totalorder %v382, %v401
          %vm405 = vcmp.ge.s32.totalorder %v383, %v401
          %vm406 = vcmp.ge.s32.totalorder %v384, %v401
          %vm407 = vcmp.ge.s32.totalorder %v385, %v401
          %vm408 = vcmp.ge.s32.totalorder %v386, %v401
          %vm409 = vcmp.ge.s32.totalorder %v387, %v401
          %vm410 = vcmp.ge.s32.totalorder %v388, %v401
          %vm411 = vcmp.ge.s32.totalorder %v389, %v401
          %vm412 = vcmp.ge.s32.totalorder %v390, %v401
          %vm413 = vcmp.ge.s32.totalorder %v391, %v401
          %vm414 = vcmp.ge.s32.totalorder %v392, %v401
          %vm415 = vcmp.ge.s32.totalorder %v393, %v401
          %vm416 = vcmp.ge.s32.totalorder %v394, %v401
          %vm417 = vcmp.ge.s32.totalorder %v395, %v401
          %v418 = vlaneseq
          %v419 = vshrl.u32 %v418, 7
          %v420 = vsub.s32 0, %v419
          %v421 = vrot.slane %v397, %v420
          %vm422 = vcmp.lt.s32.totalorder %v380, %v421
          %vm423 = vcmp.lt.s32.totalorder %v381, %v421
          %vm424 = vcmp.lt.s32.totalorder %v382, %v421
          %vm425 = vcmp.lt.s32.totalorder %v383, %v421
          %vm426 = vcmp.lt.s32.totalorder %v384, %v421
          %vm427 = vcmp.lt.s32.totalorder %v385, %v421
          %vm428 = vcmp.lt.s32.totalorder %v386, %v421
          %vm429 = vcmp.lt.s32.totalorder %v387, %v421
          %vm430 = vcmp.lt.s32.totalorder %v388, %v421
          %vm431 = vcmp.lt.s32.totalorder %v389, %v421
          %vm432 = vcmp.lt.s32.totalorder %v390, %v421
          %vm433 = vcmp.lt.s32.totalorder %v391, %v421
          %vm434 = vcmp.lt.s32.totalorder %v392, %v421
          %vm435 = vcmp.lt.s32.totalorder %v393, %v421
          %vm436 = vcmp.lt.s32.totalorder %v394, %v421
          %vm437 = vcmp.lt.s32.totalorder %v395, %v421
          %vm438 = vmand %vm402, %vm422
          %vm439 = vmand %vm403, %vm423
          %vm440 = vmand %vm404, %vm424
          %vm441 = vmand %vm405, %vm425
          %vm442 = vmand %vm406, %vm426
          %vm443 = vmand %vm407, %vm427
          %vm444 = vmand %vm408, %vm428
          %vm445 = vmand %vm409, %vm429
          %vm446 = vmand %vm410, %vm430
          %vm447 = vmand %vm411, %vm431
          %vm448 = vmand %vm412, %vm432
          %vm449 = vmand %vm413, %vm433
          %vm450 = vmand %vm414, %vm434
          %vm451 = vmand %vm415, %vm435
          %vm452 = vmand %vm416, %vm436
          %vm453 = vmand %vm417, %vm437
          %v454 = vsel %vm438, 1, 0
          %v455 = vsel %vm439, 1, 0
          %v456 = vsel %vm440, 1, 0
          %v457 = vsel %vm441, 1, 0
          %v458 = vsel %vm442, 1, 0
          %v459 = vsel %vm443, 1, 0
          %v460 = vsel %vm444, 1, 0
          %v461 = vsel %vm445, 1, 0
          %v462 = vsel %vm446, 1, 0
          %v463 = vsel %vm447, 1, 0
          %v464 = vsel %vm448, 1, 0
          %v465 = vsel %vm449, 1, 0
          %v466 = vsel %vm450, 1, 0
          %v467 = vsel %vm451, 1, 0
          %v468 = vsel %vm452, 1, 0
          %v469 = vsel %vm453, 1, 0
          %v470 = vcvt.s32.f32 %v454
          %v471 = vcvt.s32.f32 %v455
          %v472 = vcvt.s32.f32 %v456
          %v473 = vcvt.s32.f32 %v457
          %v474 = vcvt.s32.f32 %v458
          %v475 = vcvt.s32.f32 %v459
          %v476 = vcvt.s32.f32 %v460
          %v477 = vcvt.s32.f32 %v461
          %v478 = vcvt.s32.f32 %v462
          %v479 = vcvt.s32.f32 %v463
          %v480 = vcvt.s32.f32 %v464
          %v481 = vcvt.s32.f32 %v465
          %v482 = vcvt.s32.f32 %v466
          %v483 = vcvt.s32.f32 %v467
          %v484 = vcvt.s32.f32 %v468
          %v485 = vcvt.s32.f32 %v469
          %v486 = vld [vmem:[#allocation2] sm:$0xff]
          %v487 = vld [vmem:[#allocation2 + $0x8] sm:$0xff]
          %v488 = vld [vmem:[#allocation2 + $0x10] sm:$0xff]
          %v489 = vld [vmem:[#allocation2 + $0x18] sm:$0xff]
          %v490 = vld [vmem:[#allocation2 + $0x20] sm:$0xff]
          %v491 = vld [vmem:[#allocation2 + $0x28] sm:$0xff]
          %v492 = vld [vmem:[#allocation2 + $0x30] sm:$0xff]
          %v493 = vld [vmem:[#allocation2 + $0x38] sm:$0xff]
          %v494 = vld [vmem:[#allocation2 + $0x40] sm:$0xff]
          %v495 = vld [vmem:[#allocation2 + $0x48] sm:$0xff]
          %v496 = vld [vmem:[#allocation2 + $0x50] sm:$0xff]
          %v497 = vld [vmem:[#allocation2 + $0x58] sm:$0xff]
          %v498 = vld [vmem:[#allocation2 + $0x60] sm:$0xff]
          %v499 = vld [vmem:[#allocation2 + $0x68] sm:$0xff]
          %v500 = vld [vmem:[#allocation2 + $0x70] sm:$0xff]
          %v501 = vld [vmem:[#allocation2 + $0x78] sm:$0xff]
          %v502 = vld [vmem:[%s246] sm:$0xff]
          %v503 = vld [vmem:[%s246 + $0x8] sm:$0xff]
          %v504 = vld [vmem:[%s246 + $0x10] sm:$0xff]
          %v505 = vld [vmem:[%s246 + $0x18] sm:$0xff]
          %v506 = vld [vmem:[%s246 + $0x20] sm:$0xff]
          %v507 = vld [vmem:[%s246 + $0x28] sm:$0xff]
          %v508 = vld [vmem:[%s246 + $0x30] sm:$0xff]
          %v509 = vld [vmem:[%s246 + $0x38] sm:$0xff]
          %v510 = vld [vmem:[%s246 + $0x40] sm:$0xff]
          %v511 = vld [vmem:[%s246 + $0x48] sm:$0xff]
          %v512 = vld [vmem:[%s246 + $0x50] sm:$0xff]
          %v513 = vld [vmem:[%s246 + $0x58] sm:$0xff]
          %v514 = vld [vmem:[%s246 + $0x60] sm:$0xff]
          %v515 = vld [vmem:[%s246 + $0x68] sm:$0xff]
          %v516 = vld [vmem:[%s246 + $0x70] sm:$0xff]
          %v517 = vld [vmem:[%s246 + $0x78] sm:$0xff]
          %518 = vmatprep.subr.mxu0 0.0
          %519 = vmatpush1.msra.mxu0 %v502
          %520 = vmatprep.subr.mxu0 0.0
          %521 = vmatpush1.msra.mxu0 %v503
          %522 = vmatprep.subr.mxu0 0.0
          %523 = vmatpush1.msra.mxu0 %v504
          %524 = vmatprep.subr.mxu0 0.0
          %525 = vmatpush1.msra.mxu0 %v505
          %526 = vmatprep.subr.mxu0 0.0
          %527 = vmatpush1.msra.mxu0 %v506
          %528 = vmatprep.subr.mxu0 0.0
          %529 = vmatpush1.msra.mxu0 %v507
          %530 = vmatprep.subr.mxu0 0.0
          %531 = vmatpush1.msra.mxu0 %v508
          %532 = vmatprep.subr.mxu0 0.0
          %533 = vmatpush1.msra.mxu0 %v509
          %534 = vmatprep.subr.mxu0 0.0
          %535 = vmatpush1.msra.mxu0 %v510
          %536 = vmatprep.subr.mxu0 0.0
          %537 = vmatpush1.msra.mxu0 %v511
          %538 = vmatprep.subr.mxu0 0.0
          %539 = vmatpush1.msra.mxu0 %v512
          %540 = vmatprep.subr.mxu0 0.0
          %541 = vmatpush1.msra.mxu0 %v513
          %542 = vmatprep.subr.mxu0 0.0
          %543 = vmatpush1.msra.mxu0 %v514
          %544 = vmatprep.subr.mxu0 0.0
          %545 = vmatpush1.msra.mxu0 %v515
          %546 = vmatprep.subr.mxu0 0.0
          %547 = vmatpush1.msra.mxu0 %v516
          %548 = vmatprep.subr.mxu0 0.0
          %549 = vmatpush1.msra.mxu0 %v517
          %550 = vmatprep.subr.mxu0 0.0
          %551 = vmatpush1.msra.mxu0 0.0
          %552 = vmatprep.subr.mxu0 0.0
          %553 = vmatpush1.msra.mxu0 0.0
          %554 = vmatprep.subr.mxu0 0.0
          %555 = vmatpush1.msra.mxu0 0.0
          %556 = vmatprep.subr.mxu0 0.0
          %557 = vmatpush1.msra.mxu0 0.0
          %558 = vmatprep.subr.mxu0 0.0
          %559 = vmatpush1.msra.mxu0 0.0
          %560 = vmatprep.subr.mxu0 0.0
          %561 = vmatpush1.msra.mxu0 0.0
          %562 = vmatprep.subr.mxu0 0.0
          %563 = vmatpush1.msra.mxu0 0.0
          %564 = vmatprep.subr.mxu0 0.0
          %565 = vmatpush1.msra.mxu0 0.0
          %566 = vmatprep.subr.mxu0 0.0
          %567 = vmatpush1.msra.mxu0 0.0
          %568 = vmatprep.subr.mxu0 0.0
          %569 = vmatpush1.msra.mxu0 0.0
          %570 = vmatprep.subr.mxu0 0.0
          %571 = vmatpush1.msra.mxu0 0.0
          %572 = vmatprep.subr.mxu0 0.0
          %573 = vmatpush1.msra.mxu0 0.0
          %574 = vmatprep.subr.mxu0 0.0
          %575 = vmatpush1.msra.mxu0 0.0
          %576 = vmatprep.subr.mxu0 0.0
          %577 = vmatpush1.msra.mxu0 0.0
          %578 = vmatprep.subr.mxu0 0.0
          %579 = vmatpush1.msra.mxu0 0.0
          %580 = vmatprep.subr.mxu0 0.0
          %581 = vmatpush1.msra.mxu0 0.0
          %582 = vmatprep.mubr.f32.mxu0 0.0
          %583 = vmatmul.mubr.f32.gmra.mrb[0].mxu0 %v470
          %v584 = vpop.f32.mrb[0].mxu0
          %v585 = vadd.f32 0.0, %v584
          %v586 = vpop.f32.mrb[0].mxu0
          %587 = vmatprep.mubr.f32.mxu0 0.0
          %588 = vmatmul.mubr.f32.gmra.mrb[0].mxu0 %v471
          %v589 = vpop.f32.mrb[0].mxu0
          %v590 = vadd.f32 0.0, %v589
          %v591 = vpop.f32.mrb[0].mxu0
          %592 = vmatprep.mubr.f32.mxu0 0.0
          %593 = vmatmul.mubr.f32.gmra.mrb[0].mxu0 %v472
          %v594 = vpop.f32.mrb[0].mxu0
          %v595 = vadd.f32 0.0, %v594
          %v596 = vpop.f32.mrb[0].mxu0
          %597 = vmatprep.mubr.f32.mxu0 0.0
          %598 = vmatmul.mubr.f32.gmra.mrb[0].mxu0 %v473
          %v599 = vpop.f32.mrb[0].mxu0
          %v600 = vadd.f32 0.0, %v599
          %v601 = vpop.f32.mrb[0].mxu0
          %602 = vmatprep.mubr.f32.mxu0 0.0
          %603 = vmatmul.mubr.f32.gmra.mrb[0].mxu0 %v474
          %v604 = vpop.f32.mrb[0].mxu0
          %v605 = vadd.f32 0.0, %v604
          %v606 = vpop.f32.mrb[0].mxu0
          %607 = vmatprep.mubr.f32.mxu0 0.0
          %608 = vmatmul.mubr.f32.gmra.mrb[0].mxu0 %v475
          %v609 = vpop.f32.mrb[0].mxu0
          %v610 = vadd.f32 0.0, %v609
          %v611 = vpop.f32.mrb[0].mxu0
          %612 = vmatprep.mubr.f32.mxu0 0.0
          %613 = vmatmul.mubr.f32.gmra.mrb[0].mxu0 %v476
          %v614 = vpop.f32.mrb[0].mxu0
          %v615 = vadd.f32 0.0, %v614
          %v616 = vpop.f32.mrb[0].mxu0
          %617 = vmatprep.mubr.f32.mxu0 0.0
          %618 = vmatmul.mubr.f32.gmra.mrb[0].mxu0 %v477
          %v619 = vpop.f32.mrb[0].mxu0
          %v620 = vadd.f32 0.0, %v619
          %v621 = vpop.f32.mrb[0].mxu0
          %622 = vmatprep.mubr.f32.mxu0 0.0
          %623 = vmatmul.mubr.f32.gmra.mrb[0].mxu0 %v478
          %v624 = vpop.f32.mrb[0].mxu0
          %v625 = vadd.f32 0.0, %v624
          %v626 = vpop.f32.mrb[0].mxu0
          %627 = vmatprep.mubr.f32.mxu0 0.0
          %628 = vmatmul.mubr.f32.gmra.mrb[0].mxu0 %v479
          %v629 = vpop.f32.mrb[0].mxu0
          %v630 = vadd.f32 0.0, %v629
          %v631 = vpop.f32.mrb[0].mxu0
          %632 = vmatprep.mubr.f32.mxu0 0.0
          %633 = vmatmul.mubr.f32.gmra.mrb[0].mxu0 %v480
          %v634 = vpop.f32.mrb[0].mxu0
          %v635 = vadd.f32 0.0, %v634
          %v636 = vpop.f32.mrb[0].mxu0
          %637 = vmatprep.mubr.f32.mxu0 0.0
          %638 = vmatmul.mubr.f32.gmra.mrb[0].mxu0 %v481
          %v639 = vpop.f32.mrb[0].mxu0
          %v640 = vadd.f32 0.0, %v639
          %v641 = vpop.f32.mrb[0].mxu0
          %642 = vmatprep.mubr.f32.mxu0 0.0
          %643 = vmatmul.mubr.f32.gmra.mrb[0].mxu0 %v482
          %v644 = vpop.f32.mrb[0].mxu0
          %v645 = vadd.f32 0.0, %v644
          %v646 = vpop.f32.mrb[0].mxu0
          %647 = vmatprep.mubr.f32.mxu0 0.0
          %648 = vmatmul.mubr.f32.gmra.mrb[0].mxu0 %v483
          %v649 = vpop.f32.mrb[0].mxu0
          %v650 = vadd.f32 0.0, %v649
          %v651 = vpop.f32.mrb[0].mxu0
          %652 = vmatprep.mubr.f32.mxu0 0.0
          %653 = vmatmul.mubr.f32.gmra.mrb[0].mxu0 %v484
          %v654 = vpop.f32.mrb[0].mxu0
          %v655 = vadd.f32 0.0, %v654
          %v656 = vpop.f32.mrb[0].mxu0
          %657 = vmatprep.mubr.f32.mxu0 0.0
          %658 = vmatmul.mubr.f32.gmra.mrb[0].mxu0 %v485
          %v659 = vpop.f32.mrb[0].mxu0
          %v660 = vadd.f32 0.0, %v659
          %v661 = vpop.f32.mrb[0].mxu0
          %662 = vdwg.mxu0
          %v663 = vadd.f32 %v486, %v585
          %v664 = vadd.f32 %v487, %v590
          %v665 = vadd.f32 %v488, %v595
          %v666 = vadd.f32 %v489, %v600
          %v667 = vadd.f32 %v490, %v605
          %v668 = vadd.f32 %v491, %v610
          %v669 = vadd.f32 %v492, %v615
          %v670 = vadd.f32 %v493, %v620
          %v671 = vadd.f32 %v494, %v625
          %v672 = vadd.f32 %v495, %v630
          %v673 = vadd.f32 %v496, %v635
          %v674 = vadd.f32 %v497, %v640
          %v675 = vadd.f32 %v498, %v645
          %v676 = vadd.f32 %v499, %v650
          %v677 = vadd.f32 %v500, %v655
          %v678 = vadd.f32 %v501, %v660
          %679 = vst [vmem:[#allocation2] sm:$0xff] %v663
          %680 = vst [vmem:[#allocation2 + $0x8] sm:$0xff] %v664
          %681 = vst [vmem:[#allocation2 + $0x10] sm:$0xff] %v665
          %682 = vst [vmem:[#allocation2 + $0x18] sm:$0xff] %v666
          %683 = vst [vmem:[#allocation2 + $0x20] sm:$0xff] %v667
          %684 = vst [vmem:[#allocation2 + $0x28] sm:$0xff] %v668
          %685 = vst [vmem:[#allocation2 + $0x30] sm:$0xff] %v669
          %686 = vst [vmem:[#allocation2 + $0x38] sm:$0xff] %v670
          %687 = vst [vmem:[#allocation2 + $0x40] sm:$0xff] %v671
          %688 = vst [vmem:[#allocation2 + $0x48] sm:$0xff] %v672
          %689 = vst [vmem:[#allocation2 + $0x50] sm:$0xff] %v673
          %690 = vst [vmem:[#allocation2 + $0x58] sm:$0xff] %v674
          %691 = vst [vmem:[#allocation2 + $0x60] sm:$0xff] %v675
          %692 = vst [vmem:[#allocation2 + $0x68] sm:$0xff] %v676
          %693 = vst [vmem:[#allocation2 + $0x70] sm:$0xff] %v677
          %694 = vst [vmem:[#allocation2 + $0x78] sm:$0xff] %v678
        $region40: #{tpu_custom_call.1} parent=27 // pred_fallthru
          _
        // Predicated region
        $region41: #{tpu_custom_call.1} parent=27 // pred_check
          %p695 = pneg %p315
        $region42: #{tpu_custom_call.1} parent=27 // pred_check_branch
          %697 = sbr.rel (%p695) target = $region44
        $region43: #{tpu_custom_call.1} parent=27 // pred_region
          %v698 = vld [vmem:[#allocation2] sm:$0xff]
          %v699 = vld [vmem:[#allocation2 + $0x8] sm:$0xff]
          %v700 = vld [vmem:[#allocation2 + $0x10] sm:$0xff]
          %v701 = vld [vmem:[#allocation2 + $0x18] sm:$0xff]
          %v702 = vld [vmem:[#allocation2 + $0x20] sm:$0xff]
          %v703 = vld [vmem:[#allocation2 + $0x28] sm:$0xff]
          %v704 = vld [vmem:[#allocation2 + $0x30] sm:$0xff]
          %v705 = vld [vmem:[#allocation2 + $0x38] sm:$0xff]
          %v706 = vld [vmem:[#allocation2 + $0x40] sm:$0xff]
          %v707 = vld [vmem:[#allocation2 + $0x48] sm:$0xff]
          %v708 = vld [vmem:[#allocation2 + $0x50] sm:$0xff]
          %v709 = vld [vmem:[#allocation2 + $0x58] sm:$0xff]
          %v710 = vld [vmem:[#allocation2 + $0x60] sm:$0xff]
          %v711 = vld [vmem:[#allocation2 + $0x68] sm:$0xff]
          %v712 = vld [vmem:[#allocation2 + $0x70] sm:$0xff]
          %v713 = vld [vmem:[#allocation2 + $0x78] sm:$0xff]
          %714 = vst [vmem:[%s281] sm:$0xff] %v698
          %715 = vst [vmem:[%s281 + $0x8] sm:$0xff] %v699
          %716 = vst [vmem:[%s281 + $0x10] sm:$0xff] %v700
          %717 = vst [vmem:[%s281 + $0x18] sm:$0xff] %v701
          %718 = vst [vmem:[%s281 + $0x20] sm:$0xff] %v702
          %719 = vst [vmem:[%s281 + $0x28] sm:$0xff] %v703
          %720 = vst [vmem:[%s281 + $0x30] sm:$0xff] %v704
          %721 = vst [vmem:[%s281 + $0x38] sm:$0xff] %v705
          %722 = vst [vmem:[%s281 + $0x40] sm:$0xff] %v706
          %723 = vst [vmem:[%s281 + $0x48] sm:$0xff] %v707
          %724 = vst [vmem:[%s281 + $0x50] sm:$0xff] %v708
          %725 = vst [vmem:[%s281 + $0x58] sm:$0xff] %v709
          %726 = vst [vmem:[%s281 + $0x60] sm:$0xff] %v710
          %727 = vst [vmem:[%s281 + $0x68] sm:$0xff] %v711
          %728 = vst [vmem:[%s281 + $0x70] sm:$0xff] %v712
          %729 = vst [vmem:[%s281 + $0x78] sm:$0xff] %v713
        $region44: #{tpu_custom_call.1} parent=27 // pred_fallthru
          _
        %s730 = sand.u32 %s146, 1
        %s731 = scalar_lea.sflag [#allocation8], %s730
        %s732 = sand.u32 %s146, 1
        %s733 = smul.addr %s732, 128
        %s734 = scalar_lea.vmem [#allocation9], %s733
        // Predicated region
        $region45: #{tpu_custom_call.1} parent=27 // pred_check
          %p735 = pneg %p156
        $region46: #{tpu_custom_call.1} parent=27 // pred_check_branch
          %737 = sbr.rel (%p735) target = $region48
        $region47: #{tpu_custom_call.1} parent=27 // pred_region
          %s738 = smul.u32 16, %s35
          %s740 = ssub.s32 2048, 2048
          %741 = vsyncadd %s731, %s740
          %s742 = smul.addr %s34, 16
          %s743 = sadd.s32 %s738, %s742
          %s744 = smul.addr %s743, 128
          %s745 = scalar_lea.hbm %s4, %s744
          %s746 = sshll.u32 %s734, 4
          %s747 = int_to_ptr.vmem [resolvable:$true] %s746
          %752 = dma.vmem_to_hbm [thread:$0]  %s747, 2048, %s745, %s731, 128, 128, 8
        $region48: #{tpu_custom_call.1} parent=27 // pred_fallthru
          _
      $region28: #{tpu_custom_call.1} parent=5 // pred_fallthru
        _
      %p753 = scmp.le.s32.totalorder 2, %s24
      // Predicated region
      $region49: #{tpu_custom_call.1} parent=5 // pred_check
        %p754 = pneg %p753
      $region50: #{tpu_custom_call.1} parent=5 // pred_check_branch
        %756 = sbr.rel (%p754) target = $region52
      $region51: #{tpu_custom_call.1} parent=5 // pred_region
        %s757 = ssub.s32 %s24, 2
        // Predicated region
        $region53: #{tpu_custom_call.1} parent=51 // pred_check
          %p758 = pneg %p162
        $region54: #{tpu_custom_call.1} parent=51 // pred_check_branch
          %760 = sbr.rel (%p758) target = $region56
        $region55: #{tpu_custom_call.1} parent=51 // pred_region
          %s761 = sand.u32 %s147, 1
          %s762 = scalar_lea.sflag [#allocation8], %s761
          %s763 = sand.u32 %s147, 1
          %s764 = smul.addr %s763, 128
          %s765 = scalar_lea.vmem [#allocation9], %s764
          %766 = dma.done %s762, 2048
        $region56: #{tpu_custom_call.1} parent=51 // pred_fallthru
          _
      $region52: #{tpu_custom_call.1} parent=5 // pred_fallthru
        _
    $region6: #{tpu_custom_call.1} parent=1 // loop_footer
      %s28 = sadd.s32 1, %s24
    $region7: #{tpu_custom_call.1} parent=1 // loop_footer_branch
      %23 = sbr.rel target = $region3
    $region8: #{tpu_custom_call.1} parent=1 // loop_exit
      _
    %767 = vsyncpa [#allocation7], 1
    %s768 = scalar_lea.sflag [#allocation7], 1
    %769 = vsyncpa %s768, 1
    %770 = vsyncpa [#allocation8], 1
    %s771 = scalar_lea.sflag [#allocation8], 1
    %772 = vsyncpa %s771, 1

</llo_original>
